<compile_context>
chip_gen: v7x
topology: tpu7x:2x2x1
jax: 0.10.0
libtpu: 0.0.40
codegen_flags: <defaults>
</compile_context>

<pallas_src>
import functools

import jax
import jax.numpy as jnp
from jax import lax
from jax.experimental import pallas as pl
from jax.experimental.pallas import tpu as pltpu

LANE = 128


def _round_up(x, m):
    return (x + m - 1) // m * m


def _cdiv(a, b):
    return (a + b - 1) // b


def _vmem_capacity_bytes():
    """Physical VMEM of the current TPU generation (fallback: v7x's 64 MiB)."""
    try:
        cap = int(getattr(pltpu.get_tpu_info(), "vmem_capacity_bytes", 0))
        if cap > 0:
            return cap
    except Exception:
        pass
    return 64 * 1024 * 1024


# ---------------------------------------------------------------------------
# Kernels
# ---------------------------------------------------------------------------
def _n2g_kernel_single(x_ref, w_ref, b_ref, o_ref):
    """Whole K in a single tile: no accumulator round-trip.

    x_ref: (TM, K)      activations (f32 or bf16)
    w_ref: (F_pad, K)   weights (constant index_map -> DMA'd from HBM once)
    b_ref: (1, F_pad)   bias (f32)
    o_ref: (TM, F_pad)  output (f32)
    """
    acc = lax.dot_general(
        x_ref[...], w_ref[...],
        dimension_numbers=(((1,), (1,)), ((), ())),
        preferred_element_type=jnp.float32)
    o_ref[...] = (acc + b_ref[...]).astype(o_ref.dtype)


def _n2g_kernel_multi(x_ref, w_ref, b_ref, o_ref, acc_ref, *,
                      tk, k_total, mask_k, weight_resident):
    """K-tiled reduction with an f32 VMEM accumulator.

    x_ref:   (TM, TK)
    w_ref:   (grid_k, F_pad, TK) if weight_resident (DMA'd once, indexed by k)
             else (F_pad, TK)    (tiled weight, re-fetched)
    b_ref:   (1, F_pad)
    o_ref:   (TM, F_pad)
    acc_ref: (TM, F_pad) f32 scratch, lives across the K steps of one m-tile.
    """
    k = pl.program_id(1)

    @pl.when(k == 0)
    def _():
        # Initialize the accumulator with the bias: saves the VPU add in the
        # finalize step.
        acc_ref[...] = jnp.broadcast_to(b_ref[...], acc_ref.shape)

    x = x_ref[...]
    if mask_k:  # static: K % TK != 0 -> zero out-of-range (undefined) columns
        col = k * tk + lax.broadcasted_iota(jnp.int32, x.shape, 1)
        x = jnp.where(col < k_total, x, jnp.zeros_like(x))

    w = w_ref[k] if weight_resident else w_ref[...]

    acc_ref[...] += lax.dot_general(
        x, w,
        dimension_numbers=(((1,), (1,)), ((), ())),
        preferred_element_type=jnp.float32)

    @pl.when(k == pl.num_programs(1) - 1)
    def _():
        o_ref[...] = acc_ref[...].astype(o_ref.dtype)


# ---------------------------------------------------------------------------
# Wrapper
# ---------------------------------------------------------------------------
def node2graph(x, weight, bias, *, compute_dtype=jnp.float32,
               tm_max=1024, tk_max=None, weight_resident=None):
    """Pallas implementation of Node2Graph.forward (Conv2d, kernel (dim, 1)).

    Args:
      x:      (N, C, H, W) float32, NCHW like PyTorch.
      weight: (F, C, H, 1) float32, PyTorch Conv2d weight layout.
      bias:   (F,) float32.
      compute_dtype: matmul operand dtype (f32 or bf16); accumulation is
        always f32.  bfloat16 is recommended at production shapes (HBM-bound).
      tm_max/tk_max: tile caps (mainly used by tests to force tiled paths).
      weight_resident: force/disable the VMEM-resident weight slab in the
        K-tiled path (None = decide from the VMEM budget).

    Returns:
      (N, F, 1, W) float32.
    """
    N, C, H, W = x.shape
    F = weight.shape[0]
    assert weight.shape == (F, C, H, 1), weight.shape
    K = C * H
    M = N * W

    compute_dtype = jnp.dtype(compute_dtype)
    itemsize = compute_dtype.itemsize
    m_align = 16 if itemsize < 4 else 8          # bf16 packs 2 rows / sublane
    F_pad = _round_up(F, LANE)
    K128 = _round_up(K, LANE)

    # ---- generation-aware VMEM budget (v5e/v6e ~96 MiB, v7x ~48 MiB) ------
    vmem_limit = max(32 * 1024 * 1024, int(0.75 * _vmem_capacity_bytes()))
    tile_budget = int(0.8 * vmem_limit)          # headroom for internal scratch

    # ---- M tiling: balanced tiles; keep grid_m >= 2 (megacore) when M allows
    tm_cap = max(m_align, min(tm_max, _round_up(M, m_align)))
    if M >= 2 * m_align:
        tm_cap = min(tm_cap, _round_up(_cdiv(M, 2), m_align))
    grid_m = _cdiv(M, tm_cap)
    TM = M if grid_m == 1 else _round_up(_cdiv(M, grid_m), m_align)
    grid_m = _cdiv(M, TM)
    if grid_m == 1:
        TM = M

    # ---- K tiling, constrained by the VMEM budget -------------------------
    def k_plan(tm):
        fixed = 2 * tm * F_pad * 4 + 2 * 8 * F_pad * 4       # out (x2) + bias
        rem = tile_budget - fixed
        # (a) whole K in one tile: x tile + full weight resident, no acc.
        if tk_max is None or K <= tk_max:
            if 2 * tm * K * itemsize + 2 * F_pad * K * itemsize <= rem:
                return dict(grid_k=1, tk=K, k_w=K, resident=True)
        # (b) K-tiled reduction with an f32 accumulator.
        rem -= tm * F_pad * 4                                 # acc scratch
        res_bytes = 2 * F_pad * K128 * itemsize               # resident weight
        if weight_resident is None:
            resident = res_bytes <= rem // 2
        else:
            resident = bool(weight_resident)
        if resident:
            per_col = 2 * tm * itemsize
            tk_fit = (rem - res_bytes) // max(per_col, 1)
        else:
            per_col = 2 * (tm + F_pad) * itemsize
            tk_fit = rem // max(per_col, 1)
        tk_cap = (tk_fit // LANE) * LANE
        if tk_max is not None:
            tk_cap = min(tk_cap, max(LANE, (tk_max // LANE) * LANE))
        tk_cap = min(tk_cap, K128)
        if tk_cap < LANE:
            return None
        gk = _cdiv(K128, tk_cap)
        tk = _round_up(_cdiv(K128, gk), LANE)
        gk = _cdiv(K, tk)
        return dict(grid_k=gk, tk=tk, k_w=gk * tk, resident=resident)

    plan = k_plan(TM)
    while plan is None and TM > m_align:
        TM = max(m_align, _round_up(_cdiv(TM, 2), m_align))
        grid_m = _cdiv(M, TM)
        plan = k_plan(TM)
    if plan is None:  # pathological fallback: minimal tiles, tiled weight
        plan = dict(grid_k=_cdiv(K, LANE), tk=LANE,
                    k_w=_cdiv(K, LANE) * LANE, resident=False)

    grid_k, TK = plan["grid_k"], plan["tk"]
    K_w, resident = plan["k_w"], plan["resident"]

    # ---- Glue (plain JAX).  No copies of x: W == 1 (the production n2g case
    # after the e2n layer) is a pure reshape, and K/M padding is handled by
    # partial blocks + in-kernel masking instead of a materialized jnp.pad.
    if W == 1:
        xm = x.reshape(M, K)
    else:
        # TODO(synk): for W > 1 a real (N,C,H,W)->(N,W,C,H) transpose of x is
        # unavoidable without changing the producer's layout.
        xm = jnp.transpose(x, (0, 3, 1, 2)).reshape(M, K)
    xm = xm.astype(compute_dtype)

    wm = weight.reshape(F, K).astype(compute_dtype)
    if grid_k == 1:
        if F_pad > F:
            wm = jnp.pad(wm, ((0, F_pad - F), (0, 0)))
    else:
        if F_pad > F or K_w > K:
            wm = jnp.pad(wm, ((0, F_pad - F), (0, K_w - K)))
        if resident:
            # (F_pad, K_w) -> (grid_k, F_pad, TK): one small weight-layout
            # copy so the whole weight stays in VMEM and the kernel indexes it
            # by the k program id (DMA'd from HBM exactly once).
            wm = wm.reshape(F_pad, grid_k, TK).transpose(1, 0, 2)

    bm = bias.astype(jnp.float32).reshape(1, F)
    if F_pad > F:
        bm = jnp.pad(bm, ((0, 0), (0, F_pad - F)))

    # ---- pallas_call assembly ---------------------------------------------
    if grid_k == 1:
        kernel = _n2g_kernel_single
        grid = (grid_m,)
        in_specs = [
            pl.BlockSpec((TM, K), lambda i: (i, 0)),
            pl.BlockSpec((F_pad, K), lambda i: (0, 0)),   # constant -> 1 DMA
            pl.BlockSpec((1, F_pad), lambda i: (0, 0)),
        ]
        out_spec = pl.BlockSpec((TM, F_pad), lambda i: (i, 0))
        scratch = []
        dims = ("parallel",)
    else:
        kernel = functools.partial(
            _n2g_kernel_multi, tk=TK, k_total=K,
            mask_k=(K % TK != 0), weight_resident=resident)
        grid = (grid_m, grid_k)                           # reduction axis last
        if resident:
            w_spec = pl.BlockSpec((grid_k, F_pad, TK), lambda i, k: (0, 0, 0))
        else:
            # Weight does not fit VMEM: tiled, re-fetched per m-tile.
            w_spec = pl.BlockSpec((F_pad, TK), lambda i, k: (0, k))
        in_specs = [
            pl.BlockSpec((TM, TK), lambda i, k: (i, k)),
            w_spec,
            pl.BlockSpec((1, F_pad), lambda i, k: (0, 0)),
        ]
        out_spec = pl.BlockSpec((TM, F_pad), lambda i, k: (i, 0))
        scratch = [pltpu.VMEM((TM, F_pad), jnp.float32)]
        dims = ("parallel", "arbitrary")

    w_hbm_reads = 1 if (grid_k == 1 or resident) else grid_m
    cost = pl.CostEstimate(
        flops=2 * M * K * F_pad,
        transcendentals=0,
        bytes_accessed=int(M * K * itemsize
                           + w_hbm_reads * F_pad * K_w * itemsize
                           + M * F_pad * 4 + F_pad * 4))

    out = pl.pallas_call(
        kernel,
        out_shape=jax.ShapeDtypeStruct((M, F_pad), jnp.float32),
        grid_spec=pltpu.PrefetchScalarGridSpec(
            num_scalar_prefetch=0,
            grid=grid,
            in_specs=in_specs,
            out_specs=out_spec,
            scratch_shapes=scratch,
        ),
        compiler_params=pltpu.CompilerParams(
            dimension_semantics=dims,
            vmem_limit_bytes=vmem_limit),
        cost_estimate=cost,
    )(xm, wm, bm)

    # ---- strip the F padding, restore (N, F, 1, W) --------------------------
    y = out[:, :F]
    if W == 1:
        return y.reshape(N, F, 1, 1)
    return y.reshape(N, W, F).transpose(0, 2, 1).reshape(N, F, 1, W)


# ---------------------------------------------------------------------------
# Reference + tests
# ---------------------------------------------------------------------------
def _reference(x, weight, bias):
    y = lax.conv_general_dilated(
        x, weight, window_strides=(1, 1), padding="VALID",
        dimension_numbers=("NCHW", "OIHW", "NCHW"))
    return y + bias.reshape(1, -1, 1, 1)


if __name__ == "__main__":
    key = jax.random.PRNGKey(0)

    def make(n, c, h, w_dim, f, k):
        kx, kw, kb = jax.random.split(k, 3)
        x = jax.random.normal(kx, (n, c, h, w_dim), dtype=jnp.float32)
        w = 0.1 * jax.random.normal(kw, (f, c, h, 1), dtype=jnp.float32)
        b = 0.1 * jax.random.normal(kb, (f,), dtype=jnp.float32)
        return x, w, b

    def check(y, y_ref, tol, tag):
        y = jax.block_until_ready(y)
        assert y.shape == y_ref.shape, (tag, y.shape, y_ref.shape)
        err = float(jnp.max(jnp.abs(y - y_ref)))
        assert jnp.allclose(y, y_ref, atol=tol, rtol=tol), (tag, err)

    keys = jax.random.split(key, 3)

    # 1) Small shapes consistent with the module (W > 1 exercises the
    #    transpose path): x (2, 4, 16, 8), filters 32.  Single-K fast path,
    #    f32 and bf16-operand / f32-accumulate variants.
    x, w, b = make(2, 4, 16, 8, 32, keys[0])
    y_ref = _reference(x, w, b)
    check(node2graph(x, w, b), y_ref, 2e-3, "f32 single-K")
    check(node2graph(x, w, b, compute_dtype=jnp.bfloat16), y_ref, 6e-2,
          "bf16 single-K")

    # 2) Production-shaped n2g input (W == 1 after the e2n layer): pure
    #    reshape of x, no wrapper transpose, full-dim (non-8-aligned) M block.
    x1, w1, b1 = make(3, 4, 16, 1, 32, keys[1])
    check(node2graph(x1, w1, b1), _reference(x1, w1, b1), 2e-3, "f32 W=1")

    # 3) K-tiled path (K = 288, TK forced to 128) with the VMEM-resident
    #    weight slab and an in-kernel-masked partial last K tile.
    x2, w2, b2 = make(2, 4, 72, 8, 32, keys[2])
    y2_ref = _reference(x2, w2, b2)
    check(node2graph(x2, w2, b2, tk_max=128), y2_ref, 2e-3,
          "f32 multi-K resident-weight")

    # 4) K-tiled path with the tiled (non-resident) weight fallback.
    check(node2graph(x2, w2, b2, tk_max=128, weight_resident=False),
          y2_ref, 2e-3, "f32 multi-K tiled-weight")

    print("KERNEL_OK")
</pallas_src>

<mosaic_0001>
module attributes {stable_mosaic.version = 11 : i64} {
  func.func @_n2g_kernel_single(%arg0: i32, %arg1: memref<8x64xf32, #tpu.memory_space<vmem>>, %arg2: memref<128x64xf32, #tpu.memory_space<vmem>>, %arg3: memref<1x128xf32, #tpu.memory_space<vmem>>, %arg4: memref<8x128xf32, #tpu.memory_space<vmem>>) attributes {dimension_semantics = [#tpu.dimension_semantics<parallel>], iteration_bounds = array<i64: 2>, scalar_prefetch = 0 : i64, scratch_operands = 0 : i64, tpu.core_type = #tpu.core_type<tc>, window_params = [{transform_indices = @transform_0, window_bounds = array<i64: 8, 64>}, {pipeline_mode = #tpu.pipeline_mode<synchronous>, transform_indices = @transform_1, window_bounds = array<i64: 128, 64>}, {pipeline_mode = #tpu.pipeline_mode<synchronous>, transform_indices = @transform_2, window_bounds = array<i64: 1, 128>}, {transform_indices = @transform_3, window_bounds = array<i64: 8, 128>}]} {
    %c0 = arith.constant 0 : index
    %c0_0 = arith.constant 0 : index
    %0 = vector.load %arg1[%c0, %c0_0] : memref<8x64xf32, #tpu.memory_space<vmem>>, vector<8x64xf32>
    %c0_1 = arith.constant 0 : index
    %c0_2 = arith.constant 0 : index
    %1 = vector.load %arg2[%c0_1, %c0_2] : memref<128x64xf32, #tpu.memory_space<vmem>>, vector<128x64xf32>
    %cst = arith.constant dense<0.000000e+00> : vector<8x128xf32>
    %2 = tpu.matmul %0, %1, %cst {dimension_numbers = #tpu.dot_dimension_numbers<[1], [1], [0], [0], [0, 0, 1, 0], [], []>} : vector<8x64xf32>, vector<128x64xf32>, vector<8x128xf32> -> vector<8x128xf32>
    %c0_3 = arith.constant 0 : index
    %c0_4 = arith.constant 0 : index
    %3 = vector.load %arg3[%c0_3, %c0_4] : memref<1x128xf32, #tpu.memory_space<vmem>>, vector<1x128xf32>
    %4 = vector.broadcast %3 : vector<1x128xf32> to vector<8x128xf32>
    %5 = arith.addf %2, %4 : vector<8x128xf32>
    %c0_5 = arith.constant 0 : index
    %c0_6 = arith.constant 0 : index
    %6 = vector.load %arg4[%c0_5, %c0_6] : memref<8x128xf32, #tpu.memory_space<vmem>>, vector<8x128xf32>
    tpu.vector_store %arg4[%c0_5, %c0_6], %5 {strides = array<i32>} : memref<8x128xf32, #tpu.memory_space<vmem>>, vector<8x128xf32>,
    return
  }
  func.func @transform_0(%arg0: i32) -> (i32, i32) {
    %c0_i32 = arith.constant 0 : i32
    %c0_i32_0 = arith.constant 0 : i32
    return %arg0, %c0_i32 : i32, i32
  }
  func.func @transform_1(%arg0: i32) -> (i32, i32) {
    %c0_i32 = arith.constant 0 : i32
    %c0_i32_0 = arith.constant 0 : i32
    %c0_i32_1 = arith.constant 0 : i32
    return %c0_i32, %c0_i32_0 : i32, i32
  }
  func.func @transform_2(%arg0: i32) -> (i32, i32) {
    %c0_i32 = arith.constant 0 : i32
    %c0_i32_0 = arith.constant 0 : i32
    %c0_i32_1 = arith.constant 0 : i32
    return %c0_i32, %c0_i32_0 : i32, i32
  }
  func.func @transform_3(%arg0: i32) -> (i32, i32) {
    %c0_i32 = arith.constant 0 : i32
    %c0_i32_0 = arith.constant 0 : i32
    return %arg0, %c0_i32 : i32, i32
  }
}

</mosaic_0001>

<llo_original>
// kernel: tpu_custom_call.1
$region0: #{tpu_custom_call.1}
  #allocation0 [shape = 'u32[]', space=smem, size = 0x4, offset = 0x4, fixed_abs, tag = 'smem constant byte address 0x4 - core index']
  #allocation1 [shape = 'u32[144,128]{1,0:T(1,128)}', space=vmem, size = 0x12000, scoped, tag = 'internal scratch']
  %s0 = inlined_call_operand.vmem [shape: f32[16,64], index: 0, kind: input, shape index: {}]
  %s1 = inlined_call_operand.vmem [shape: f32[128,64], index: 1, kind: input, shape index: {}]
  %s2 = inlined_call_operand.vmem [shape: f32[1,128], index: 2, kind: input, shape index: {}]
  %s3 = inlined_call_operand.hbm [shape: f32[16,128], index: 3, kind: output, shape index: {}]
  %s4 = sld [smem:[#allocation0]]
  $region45: #{tpu_custom_call.1} parent=0
    _
  %s6 = ssub.s32 1, %s4
  %s7 = scalar_select 0, %s6, %s4
  $region1: #{tpu_custom_call.1} parent=0
    #allocation2 [shape = 'u8[8192]{0}', space=vmem, size = 0x2000, scoped, tag = 'output window, operand 0']
    #allocation3 [shape = 's32[2]{0}', space=sflag, size = 0x8, scoped, tag = 'scoped memory for tpu_custom_call.1']
    %8 = vsyncpa [#allocation3], 0
    %s9 = scalar_lea.sflag [#allocation3], 1
    %10 = vsyncpa %s9, 0
    loop: start=0, step=1, limit=4
    $region2: #{tpu_custom_call.1} parent=1 // loop_pre_header
      _
    $region3: #{tpu_custom_call.1} parent=1 // loop_header
      %s12 = sphi 0, %s16
      %p13 = scmp.ge.s32.totalorder %s12, 4
      %s22 = sphi 0, %s24
      %s25 = sphi 0, %s22
      %s26 = sphi 0, %s25
      %s42 = sphi 0, %s26
      %s46 = sphi 0, %s46
      %s48 = sphi 0, %s46
      %s49 = sphi 0, %s48
      %s63 = sphi 0, %s49
      %s67 = sphi 0, %s67
      %s69 = sphi 0, %s67
      %s70 = sphi 0, %s69
      %s84 = sphi 0, %s70
      %s90 = sphi 0, %s92
      %s93 = sphi 0, %s90
      %s94 = sphi 0, %s93
      %s110 = sphi 0, %s94
    $region4: #{tpu_custom_call.1} parent=1 // loop_header_branch
      %15 = sbr.rel (%p13) target = $region8
    $region5: #{tpu_custom_call.1} parent=1 // loop_body
      %s17 = ssub.s32 %s12, 1
      %s18 = ssub.s32 %s12, 2
      %s19 = sadd.s32 %s12, 1
      %s20 = ssub.s32 %s12, %s19
      %p21 = scmp.eq.s32.totalorder %s20, 0
      %s23 = sadd.s32 %s22, 1
      %s24 = scalar_select %p21, %s22, %s23
      %p27 = pneg %p21
      %p28 = scmp.eq.s32.totalorder %s12, 1
      %p29 = por %p27, %p28
      %p30 = scmp.ne.s32.totalorder %s22, %s25
      %p31 = scmp.eq.s32.totalorder %s12, 0
      %p32 = por %p30, %p31
      %p33 = scmp.ne.s32.totalorder %s22, %s25
      %p34 = scmp.eq.s32.totalorder %s17, 1
      %p35 = por %p33, %p34
      %p36 = scmp.ne.s32.totalorder %s25, %s26
      %p37 = scmp.eq.s32.totalorder %s17, 0
      %p38 = por %p36, %p37
      %p39 = scmp.ne.s32.totalorder %s25, %s26
      %p40 = scmp.eq.s32.totalorder %s18, 1
      %p41 = por %p39, %p40
      %p43 = scmp.ne.s32.totalorder %s26, %s42
      %p44 = scmp.eq.s32.totalorder %s18, 0
      %p45 = por %p43, %p44
      %s47 = sadd.s32 %s46, 1
      %p50 = scmp.eq.s32.totalorder %s12, 1
      %p51 = scmp.ne.s32.totalorder %s46, %s48
      %p52 = scmp.eq.s32.totalorder %s12, 0
      %p53 = por %p51, %p52
      %p54 = scmp.ne.s32.totalorder %s46, %s48
      %p55 = scmp.eq.s32.totalorder %s17, 1
      %p56 = por %p54, %p55
      %p57 = scmp.ne.s32.totalorder %s48, %s49
      %p58 = scmp.eq.s32.totalorder %s17, 0
      %p59 = por %p57, %p58
      %p60 = scmp.ne.s32.totalorder %s48, %s49
      %p61 = scmp.eq.s32.totalorder %s18, 1
      %p62 = por %p60, %p61
      %p64 = scmp.ne.s32.totalorder %s49, %s63
      %p65 = scmp.eq.s32.totalorder %s18, 0
      %p66 = por %p64, %p65
      %s68 = sadd.s32 %s67, 1
      %p71 = scmp.eq.s32.totalorder %s12, 1
      %p72 = scmp.ne.s32.totalorder %s67, %s69
      %p73 = scmp.eq.s32.totalorder %s12, 0
      %p74 = por %p72, %p73
      %p75 = scmp.ne.s32.totalorder %s67, %s69
      %p76 = scmp.eq.s32.totalorder %s17, 1
      %p77 = por %p75, %p76
      %p78 = scmp.ne.s32.totalorder %s69, %s70
      %p79 = scmp.eq.s32.totalorder %s17, 0
      %p80 = por %p78, %p79
      %p81 = scmp.ne.s32.totalorder %s69, %s70
      %p82 = scmp.eq.s32.totalorder %s18, 1
      %p83 = por %p81, %p82
      %p85 = scmp.ne.s32.totalorder %s70, %s84
      %p86 = scmp.eq.s32.totalorder %s18, 0
      %p87 = por %p85, %p86
      %s88 = ssub.s32 %s12, %s19
      %p89 = scmp.eq.s32.totalorder %s88, 0
      %s91 = sadd.s32 %s90, 1
      %s92 = scalar_select %p89, %s90, %s91
      %p95 = pneg %p89
      %p96 = scmp.eq.s32.totalorder %s12, 1
      %p97 = por %p95, %p96
      %p98 = scmp.ne.s32.totalorder %s90, %s93
      %p99 = scmp.eq.s32.totalorder %s12, 0
      %p100 = por %p98, %p99
      %p101 = scmp.ne.s32.totalorder %s90, %s93
      %p102 = scmp.eq.s32.totalorder %s17, 1
      %p103 = por %p101, %p102
      %p104 = scmp.ne.s32.totalorder %s93, %s94
      %p105 = scmp.eq.s32.totalorder %s17, 0
      %p106 = por %p104, %p105
      %p107 = scmp.ne.s32.totalorder %s93, %s94
      %p108 = scmp.eq.s32.totalorder %s18, 1
      %p109 = por %p107, %p108
      %p111 = scmp.ne.s32.totalorder %s94, %s110
      %p112 = scmp.eq.s32.totalorder %s18, 0
      %p113 = por %p111, %p112
      %p114 = scmp.le.s32.totalorder 1, %s12
      %p115 = scmp.lt.s32.totalorder %s12, 3
      %p116 = pnand %p114, %p115
      %p117 = pneg %p116
      // Predicated region
      $region9: #{tpu_custom_call.1} parent=5 // pred_check
        _
      $region10: #{tpu_custom_call.1} parent=5 // pred_check_branch
        %119 = sbr.rel (%p116) target = $region12
      $region11: #{tpu_custom_call.1} parent=5 // pred_region
        %s120 = ssub.s32 %s12, 1
        // Predicated region
        $region13: #{tpu_custom_call.1} parent=11 // pred_check
          %p121 = pneg %p59
        $region14: #{tpu_custom_call.1} parent=11 // pred_check_branch
          %123 = sbr.rel (%p121) target = $region16
        $region15: #{tpu_custom_call.1} parent=11 // pred_region
          _
        $region16: #{tpu_custom_call.1} parent=11 // pred_fallthru
          _
        // Predicated region
        $region17: #{tpu_custom_call.1} parent=11 // pred_check
          %p124 = pneg %p80
        $region18: #{tpu_custom_call.1} parent=11 // pred_check_branch
          %126 = sbr.rel (%p124) target = $region20
        $region19: #{tpu_custom_call.1} parent=11 // pred_region
          _
        $region20: #{tpu_custom_call.1} parent=11 // pred_fallthru
          _
      $region12: #{tpu_custom_call.1} parent=5 // pred_fallthru
        _
      %p127 = scmp.lt.s32.totalorder %s12, 2
      // Predicated region
      $region21: #{tpu_custom_call.1} parent=5 // pred_check
        %p128 = pneg %p127
      $region22: #{tpu_custom_call.1} parent=5 // pred_check_branch
        %130 = sbr.rel (%p128) target = $region24
      $region23: #{tpu_custom_call.1} parent=5 // pred_region
        // Predicated region
        $region25: #{tpu_custom_call.1} parent=23 // pred_check
          %p131 = pneg %p32
        $region26: #{tpu_custom_call.1} parent=23 // pred_check_branch
          %133 = sbr.rel (%p131) target = $region28
        $region27: #{tpu_custom_call.1} parent=23 // pred_region
          %p134 = scmp.lt.s32.totalorder %s12, 1
          %s135 = scalar_select %p134, %s12, 1
          %s136 = smul.addr %s135, 8
          %s137 = scalar_lea.vmem %s0, %s136
        $region28: #{tpu_custom_call.1} parent=23 // pred_fallthru
          _
      $region24: #{tpu_custom_call.1} parent=5 // pred_fallthru
        _
      %p138 = scmp.le.s32.totalorder 1, %s12
      %p139 = scmp.lt.s32.totalorder %s12, 3
      %p140 = pnand %p138, %p139
      %p141 = pneg %p140
      // Predicated region
      $region29: #{tpu_custom_call.1} parent=5 // pred_check
        _
      $region30: #{tpu_custom_call.1} parent=5 // pred_check_branch
        %143 = sbr.rel (%p140) target = $region32
      $region31: #{tpu_custom_call.1} parent=5 // pred_region
        %s144 = ssub.s32 %s12, 1
        %p145 = scmp.lt.s32.totalorder %s17, 1
        %s146 = scalar_select %p145, %s17, 1
        %s147 = smul.addr %s146, 8
        %s148 = scalar_lea.vmem %s0, %s147
        %p149 = pneg %p38
        %p150 = pneg %p35
        %p151 = pneg %p59
        %p152 = pneg %p56
        %p153 = pneg %p80
        %p154 = pneg %p77
        %p155 = pneg %p106
        %p156 = pneg %p103
        %s157 = sand.u32 %s93, 1
        %s158 = scalar_lea.sflag [#allocation3], %s157
        %s159 = sand.u32 %s93, 1
        %s160 = smul.addr %s159, 8
        %s161 = scalar_lea.vmem [#allocation2], %s160
        %p162 = scmp.lt.s32.totalorder %s17, 1
        %s163 = scalar_select %p162, %s17, 1
        %s164 = smul.addr %s163, 8
        %s165 = scalar_lea.vmem %s0, %s164
        %v166 = vld [vmem:[%s165] sm:$0xff]
        %v167 = vld [vmem:[%s1] sm:$0xff]
        %v168 = vld [vmem:[%s1 + $0x8] sm:$0xff]
        %v169 = vld [vmem:[%s1 + $0x10] sm:$0xff]
        %v170 = vld [vmem:[%s1 + $0x18] sm:$0xff]
        %v171 = vld [vmem:[%s1 + $0x20] sm:$0xff]
        %v172 = vld [vmem:[%s1 + $0x28] sm:$0xff]
        %v173 = vld [vmem:[%s1 + $0x30] sm:$0xff]
        %v174 = vld [vmem:[%s1 + $0x38] sm:$0xff]
        %v175 = vld [vmem:[%s1 + $0x40] sm:$0xff]
        %v176 = vld [vmem:[%s1 + $0x48] sm:$0xff]
        %v177 = vld [vmem:[%s1 + $0x50] sm:$0xff]
        %v178 = vld [vmem:[%s1 + $0x58] sm:$0xff]
        %v179 = vld [vmem:[%s1 + $0x60] sm:$0xff]
        %v180 = vld [vmem:[%s1 + $0x68] sm:$0xff]
        %v181 = vld [vmem:[%s1 + $0x70] sm:$0xff]
        %v182 = vld [vmem:[%s1 + $0x78] sm:$0xff]
        %v183 = vld [vmem:[%s2] sm:$0x1]
        %v185 = vlaneseq
        %v186 = vshrl.u32 %v185, 7
        %v187 = vsub.s32 0, %v186
        %v188 = vrot.slane %v183, %v187
        %vm190 = vcmask 523264
        %v192 = vsel %vm190, %v166, 0
        %v195 = vsel %vm190, %v167, 0
        %v198 = vsel %vm190, %v168, 0
        %v201 = vsel %vm190, %v169, 0
        %v204 = vsel %vm190, %v170, 0
        %v207 = vsel %vm190, %v171, 0
        %v210 = vsel %vm190, %v172, 0
        %v213 = vsel %vm190, %v173, 0
        %v216 = vsel %vm190, %v174, 0
        %v219 = vsel %vm190, %v175, 0
        %v222 = vsel %vm190, %v176, 0
        %v225 = vsel %vm190, %v177, 0
        %v228 = vsel %vm190, %v178, 0
        %v231 = vsel %vm190, %v179, 0
        %v234 = vsel %vm190, %v180, 0
        %v237 = vsel %vm190, %v181, 0
        %v240 = vsel %vm190, %v182, 0
        %242 = vmatprep.subr.mxu0 0.0
        %243 = vmatpush1.xpose.msra.mxu0 %v195
        %244 = vmatprep.subr.mxu0 0.0
        %245 = vmatpush1.xpose.msra.mxu0 %v198
        %246 = vmatprep.subr.mxu0 0.0
        %247 = vmatpush1.xpose.msra.mxu0 %v201
        %248 = vmatprep.subr.mxu0 0.0
        %249 = vmatpush1.xpose.msra.mxu0 %v204
        %250 = vmatprep.subr.mxu0 0.0
        %251 = vmatpush1.xpose.msra.mxu0 %v207
        %252 = vmatprep.subr.mxu0 0.0
        %253 = vmatpush1.xpose.msra.mxu0 %v210
        %254 = vmatprep.subr.mxu0 0.0
        %255 = vmatpush1.xpose.msra.mxu0 %v213
        %256 = vmatprep.subr.mxu0 0.0
        %257 = vmatpush1.xpose.msra.mxu0 %v216
        %258 = vmatprep.subr.mxu0 0.0
        %259 = vmatpush1.xpose.msra.mxu0 %v219
        %260 = vmatprep.subr.mxu0 0.0
        %261 = vmatpush1.xpose.msra.mxu0 %v222
        %262 = vmatprep.subr.mxu0 0.0
        %263 = vmatpush1.xpose.msra.mxu0 %v225
        %264 = vmatprep.subr.mxu0 0.0
        %265 = vmatpush1.xpose.msra.mxu0 %v228
        %266 = vmatprep.subr.mxu0 0.0
        %267 = vmatpush1.xpose.msra.mxu0 %v231
        %268 = vmatprep.subr.mxu0 0.0
        %269 = vmatpush1.xpose.msra.mxu0 %v234
        %270 = vmatprep.subr.mxu0 0.0
        %271 = vmatpush1.xpose.msra.mxu0 %v237
        %272 = vmatprep.subr.mxu0 0.0
        %273 = vmatpush1.xpose.msra.mxu0 %v240
        %274 = vmatprep.subr.mxu0 0.0
        %275 = vmatpush1.xpose.msra.mxu0 0.0
        %276 = vmatprep.subr.mxu0 0.0
        %277 = vmatpush1.xpose.msra.mxu0 0.0
        %278 = vmatprep.subr.mxu0 0.0
        %279 = vmatpush1.xpose.msra.mxu0 0.0
        %280 = vmatprep.subr.mxu0 0.0
        %281 = vmatpush1.xpose.msra.mxu0 0.0
        %282 = vmatprep.subr.mxu0 0.0
        %283 = vmatpush1.xpose.msra.mxu0 0.0
        %284 = vmatprep.subr.mxu0 0.0
        %285 = vmatpush1.xpose.msra.mxu0 0.0
        %286 = vmatprep.subr.mxu0 0.0
        %287 = vmatpush1.xpose.msra.mxu0 0.0
        %288 = vmatprep.subr.mxu0 0.0
        %289 = vmatpush1.xpose.msra.mxu0 0.0
        %290 = vmatprep.subr.mxu0 0.0
        %291 = vmatpush1.xpose.msra.mxu0 0.0
        %292 = vmatprep.subr.mxu0 0.0
        %293 = vmatpush1.xpose.msra.mxu0 0.0
        %294 = vmatprep.subr.mxu0 0.0
        %295 = vmatpush1.xpose.msra.mxu0 0.0
        %296 = vmatprep.subr.mxu0 0.0
        %297 = vmatpush1.xpose.msra.mxu0 0.0
        %298 = vmatprep.subr.mxu0 0.0
        %299 = vmatpush1.xpose.msra.mxu0 0.0
        %300 = vmatprep.subr.mxu0 0.0
        %301 = vmatpush1.xpose.msra.mxu0 0.0
        %302 = vmatprep.subr.mxu0 0.0
        %303 = vmatpush1.xpose.msra.mxu0 0.0
        %304 = vmatprep.subr.mxu0 0.0
        %305 = vmatpush1.xpose.msra.mxu0 0.0
        %306 = vmatprep.mubr.f32.mxu0 0.0
        %307 = vmatmul.mubr.f32.gmra.mrb[0].mxu0 %v192
        %v308 = vpop.f32.mrb[0].mxu0
        %v309 = vadd.f32 %v188, %v308
        %v310 = vpop.f32.mrb[0].mxu0
        %311 = vdwg.mxu0
        %312 = vst [vmem:[%s161] sm:$0xff] %v309
        %s313 = sand.u32 %s93, 1
        %s314 = scalar_lea.sflag [#allocation3], %s313
        %s315 = sand.u32 %s93, 1
        %s316 = smul.addr %s315, 8
        %s317 = scalar_lea.vmem [#allocation2], %s316
        // Predicated region
        $region33: #{tpu_custom_call.1} parent=31 // pred_check
          %p318 = pneg %p103
        $region34: #{tpu_custom_call.1} parent=31 // pred_check_branch
          %320 = sbr.rel (%p318) target = $region36
        $region35: #{tpu_custom_call.1} parent=31 // pred_region
          %s322 = ssub.s32 128, 128
          %323 = vsyncadd %s314, %s322
          %s324 = smul.addr %s17, 128
          %s325 = scalar_lea.hbm %s3, %s324
          %s327 = sshll.u32 %s317, 4
          %s328 = int_to_ptr.vmem [resolvable:$true] %s327
          %330 = dma.vmem_to_hbm [thread:$0]  %s328, 128, %s325, %s314
        $region36: #{tpu_custom_call.1} parent=31 // pred_fallthru
          _
      $region32: #{tpu_custom_call.1} parent=5 // pred_fallthru
        _
      %p331 = scmp.le.s32.totalorder 2, %s12
      // Predicated region
      $region37: #{tpu_custom_call.1} parent=5 // pred_check
        %p332 = pneg %p331
      $region38: #{tpu_custom_call.1} parent=5 // pred_check_branch
        %334 = sbr.rel (%p332) target = $region40
      $region39: #{tpu_custom_call.1} parent=5 // pred_region
        %s335 = ssub.s32 %s12, 2
        // Predicated region
        $region41: #{tpu_custom_call.1} parent=39 // pred_check
          %p336 = pneg %p109
        $region42: #{tpu_custom_call.1} parent=39 // pred_check_branch
          %338 = sbr.rel (%p336) target = $region44
        $region43: #{tpu_custom_call.1} parent=39 // pred_region
          %s339 = sand.u32 %s94, 1
          %s340 = scalar_lea.sflag [#allocation3], %s339
          %s341 = sand.u32 %s94, 1
          %s342 = smul.addr %s341, 8
          %s343 = scalar_lea.vmem [#allocation2], %s342
          %344 = dma.done %s340, 128
        $region44: #{tpu_custom_call.1} parent=39 // pred_fallthru
          _
      $region40: #{tpu_custom_call.1} parent=5 // pred_fallthru
        _
    $region6: #{tpu_custom_call.1} parent=1 // loop_footer
      %s16 = sadd.s32 1, %s12
    $region7: #{tpu_custom_call.1} parent=1 // loop_footer_branch
      %11 = sbr.rel target = $region3
    $region8: #{tpu_custom_call.1} parent=1 // loop_exit
      _
    %345 = vsyncpa [#allocation3], 1
    %s346 = scalar_lea.sflag [#allocation3], 1
    %347 = vsyncpa %s346, 1

</llo_original>
